<compile_context>
chip_gen: v7x
topology: tpu7x:2x2x1
jax: 0.10.0
libtpu: 0.0.40
codegen_flags: <defaults>
</compile_context>

<pallas_src>
import functools

import jax
import jax.numpy as jnp
from jax.experimental import pallas as pl
from jax.experimental.pallas import tpu as pltpu


def _select_mode(gate_way: str) -> str:
    # Matches the PyTorch branch priority exactly.
    if "res_filter" in gate_way:
        return "res_filter"
    elif "noproj_filter" in gate_way:
        return "noproj_filter"
    elif "dot_filter" in gate_way:
        return "dot_filter"
    raise ValueError(f"gate_way {gate_way!r} matches no branch")


def _hw_budgets():
    """Per-generation (tile byte cap, vmem_limit cap)."""
    vmem_cap = 128 << 20
    try:
        info = pltpu.get_tpu_info()
        vmem_cap = int(getattr(info, "vmem_capacity_bytes", vmem_cap))
    except Exception:
        pass
    if vmem_cap <= (64 << 20):
        # v7x-class: 64 MiB VMEM per TensorCore -> smaller tiles, conservative limit.
        return 5 << 20, 48 << 20
    # v5e / v6e: 128 MiB VMEM.
    return 8 << 20, 100 << 20


def _choose_tile_s(S, out_dim, itemsize, max_tile_bytes, max_tile_s=4096):
    """Largest S tile under the per-generation byte cap.  No divisibility
    requirement on S: the ragged last block is clipped by Pallas."""
    row_bytes = max(1, out_dim * itemsize)
    cap = min(S, max_tile_s, max(1, max_tile_bytes // row_bytes))
    if cap >= S:
        return S                      # full sequence in one block (always legal)
    return max(8, (cap // 8) * 8)     # multiple of 8 on the sublane-adjacent dim


# --------------------------------------------------------------------------
# Prelude kernel: LayerNorm -> Linear -> sigmoid for all batch rows at once.
# --------------------------------------------------------------------------
def _gate_proj_kernel(x_ref, w_ref, b_ref, gamma_ref, beta_ref,
                      gate_ref, proj_ref, *, eps):
    x = x_ref[...].astype(jnp.float32)                       # (B, in_dim)
    mean = jnp.mean(x, axis=-1, keepdims=True)
    var = jnp.mean((x - mean) ** 2, axis=-1, keepdims=True)
    xn = (x - mean) * jax.lax.rsqrt(var + eps)
    xn = xn * gamma_ref[...].astype(jnp.float32) + beta_ref[...].astype(jnp.float32)
    # MXU: weight consumed in native dtype, accumulate in f32.
    proj = jnp.dot(xn.astype(w_ref.dtype), w_ref[...],
                   preferred_element_type=jnp.float32)
    proj = proj + b_ref[...].astype(jnp.float32)              # (B, out_dim) f32
    proj_ref[...] = proj
    gate_ref[...] = jax.nn.sigmoid(proj)


def _gate_proj_prelude(img_cls_emb, params, out_dim, eps):
    B = img_cls_emb.shape[0]
    w_t = params["w_t"]                     # (in_dim, out_dim)
    b_vec = params["b"].reshape(1, -1)      # (1, out_dim)
    gamma = params["gamma"].reshape(1, -1)  # (1, in_dim)
    beta = params["beta"].reshape(1, -1)    # (1, in_dim)
    gate, proj = pl.pallas_call(
        functools.partial(_gate_proj_kernel, eps=eps),
        out_shape=(jax.ShapeDtypeStruct((B, out_dim), jnp.float32),
                   jax.ShapeDtypeStruct((B, out_dim), jnp.float32)),
    )(img_cls_emb, w_t, b_vec, gamma, beta)
    return gate, proj


# --------------------------------------------------------------------------
# Streaming kernels: pure mem-bound elementwise gating over (B, S-tiles) grid.
# gate/proj blocks are (1, 1, out_dim); hidden/out blocks are (1, TILE_S, out_dim).
# --------------------------------------------------------------------------
def _apply_res_kernel(gate_ref, proj_ref, hidden_ref, out_ref):
    h = hidden_ref[...].astype(jnp.float32)
    out_ref[...] = (h * gate_ref[...] + proj_ref[...]).astype(out_ref.dtype)


def _apply_dot_kernel(gate_ref, hidden_ref, out_ref):
    h = hidden_ref[...].astype(jnp.float32)
    out_ref[...] = (h * gate_ref[...]).astype(out_ref.dtype)


def _apply_noproj_kernel(x_ref, hidden_ref, out_ref):
    gate = jax.nn.sigmoid(x_ref[...].astype(jnp.float32))     # (1, 1, out_dim)
    h = hidden_ref[...].astype(jnp.float32)
    out_ref[...] = (h * gate).astype(out_ref.dtype)


def task_guided_gate_forward(img_cls_emb, hidden_embeds, params, gate_way, *,
                             eps=1e-5, donate_hidden=False):
    """Pallas-backed forward pass of task_guided_gate."""
    mode = _select_mode(gate_way)

    B, S, out_dim = hidden_embeds.shape
    itemsize = jnp.dtype(hidden_embeds.dtype).itemsize
    tile_cap_bytes, vmem_limit_cap = _hw_budgets()
    tile_s = _choose_tile_s(S, out_dim, itemsize, tile_cap_bytes)
    grid = (B, pl.cdiv(S, tile_s))
    tile_bytes = tile_s * out_dim * itemsize

    # TODO(synk): if a model uses out_dim not a multiple of 128, pad the lane dim
    # at the wrapper so stores stay unmasked/lane-dense (here out_dim is 128-aligned).
    hidden_spec = pl.BlockSpec((1, tile_s, out_dim), lambda b, j: (b, j, 0))
    out_spec = pl.BlockSpec((1, tile_s, out_dim), lambda b, j: (b, j, 0))
    row_spec = pl.BlockSpec((1, 1, out_dim), lambda b, j: (b, 0, 0))

    if mode == "noproj_filter":
        if img_cls_emb.shape[-1] != out_dim:
            raise ValueError("noproj_filter requires img_cls_emb feature dim == out_dim")
        x_rows = img_cls_emb.reshape(B, 1, out_dim)
        inputs = (x_rows, hidden_embeds)
        in_specs = [row_spec, hidden_spec]
        kernel = _apply_noproj_kernel
        hidden_index = 1
        fixed_bytes = out_dim * jnp.dtype(img_cls_emb.dtype).itemsize
    else:
        gate, proj = _gate_proj_prelude(img_cls_emb, params, out_dim, eps)
        gate = gate.reshape(B, 1, out_dim)
        proj = proj.reshape(B, 1, out_dim)
        if mode == "res_filter":
            inputs = (gate, proj, hidden_embeds)
            in_specs = [row_spec, row_spec, hidden_spec]
            kernel = _apply_res_kernel
            hidden_index = 2
            fixed_bytes = 2 * out_dim * 4
        else:  # dot_filter
            inputs = (gate, hidden_embeds)
            in_specs = [row_spec, hidden_spec]
            kernel = _apply_dot_kernel
            hidden_index = 1
            fixed_bytes = out_dim * 4

    # 2 streamed arrays (hidden in + out) x 2 buffers x tile + resident rows + headroom,
    # capped per-generation (<=48 MiB on 64-MiB-VMEM parts).
    vmem_limit = int(min(vmem_limit_cap,
                         max(16 << 20, 4 * tile_bytes + 4 * fixed_bytes + (4 << 20))))

    io_aliases = {hidden_index: 0} if donate_hidden else {}

    return pl.pallas_call(
        kernel,
        out_shape=jax.ShapeDtypeStruct(hidden_embeds.shape, hidden_embeds.dtype),
        grid_spec=pltpu.PrefetchScalarGridSpec(
            num_scalar_prefetch=0,
            grid=grid,
            in_specs=in_specs,
            out_specs=out_spec),
        input_output_aliases=io_aliases,
        compiler_params=pltpu.CompilerParams(
            # No state carried across grid steps -> both axes parallel
            # (megacore-shardable on either axis, no idle TC for B==1).
            dimension_semantics=("parallel", "parallel"),
            vmem_limit_bytes=vmem_limit),
    )(*inputs)


def _reference_forward(img_cls_emb, hidden_embeds, params, gate_way, eps=1e-5):
    """Pure-JAX reference matching the PyTorch module semantics."""
    mode = _select_mode(gate_way)
    x = img_cls_emb.astype(jnp.float32)
    hidden = hidden_embeds.astype(jnp.float32)
    if mode == "noproj_filter":
        return hidden * jax.nn.sigmoid(x)[:, None, :]
    mean = jnp.mean(x, axis=-1, keepdims=True)
    var = jnp.mean((x - mean) ** 2, axis=-1, keepdims=True)
    xn = (x - mean) / jnp.sqrt(var + eps)
    xn = xn * params["gamma"] + params["beta"]
    proj = xn @ params["w_t"] + params["b"]
    gate = jax.nn.sigmoid(proj)
    if mode == "res_filter":
        return hidden * gate[:, None, :] + proj[:, None, :]
    return hidden * gate[:, None, :]


if __name__ == "__main__":
    # Small shapes consistent with the module (Linear(in_dim -> out_dim), LayerNorm(in_dim)).
    B, S = 2, 16
    in_dim, out_dim = 128, 256

    key = jax.random.PRNGKey(0)
    k_x, k_h, k_w, k_b = jax.random.split(key, 4)

    img_cls_emb = jax.random.normal(k_x, (B, in_dim), dtype=jnp.float32)
    hidden_embeds = jax.random.normal(k_h, (B, S, out_dim), dtype=jnp.float32)

    params = {
        "w_t": jax.random.normal(k_w, (in_dim, out_dim), dtype=jnp.float32) * 0.02,
        "b": jax.random.normal(k_b, (out_dim,), dtype=jnp.float32) * 0.01,
        "gamma": jnp.ones((in_dim,), dtype=jnp.float32),
        "beta": jnp.zeros((in_dim,), dtype=jnp.float32),
    }

    ok = True
    for gate_way in ("res_filter", "dot_filter"):
        out = jax.block_until_ready(
            task_guided_gate_forward(img_cls_emb, hidden_embeds, params, gate_way))
        ref = _reference_forward(img_cls_emb, hidden_embeds, params, gate_way)
        ok &= bool(jnp.allclose(out, ref, atol=1e-4, rtol=1e-4))

    # noproj_filter branch requires feature dim == out_dim (same implicit contract as PyTorch).
    img_sq = jax.random.normal(k_x, (B, out_dim), dtype=jnp.float32)
    out = jax.block_until_ready(
        task_guided_gate_forward(img_sq, hidden_embeds, params, "noproj_filter"))
    ref = _reference_forward(img_sq, hidden_embeds, params, "noproj_filter")
    ok &= bool(jnp.allclose(out, ref, atol=1e-4, rtol=1e-4))

    # bf16 hidden path: streaming stays bf16 in HBM/VMEM, gating math is f32 in vregs.
    hidden_bf16 = hidden_embeds.astype(jnp.bfloat16)
    out = jax.block_until_ready(
        task_guided_gate_forward(img_cls_emb, hidden_bf16, params, "res_filter"))
    ref = _reference_forward(img_cls_emb, hidden_bf16, params, "res_filter")
    ok &= bool(jnp.allclose(out.astype(jnp.float32), ref, atol=2e-2, rtol=2e-2))

    if ok:
        print("KERNEL_OK")
    else:
        raise SystemExit("mismatch vs reference")
</pallas_src>

<mosaic_0001>
module attributes {stable_mosaic.version = 11 : i64} {
  func.func @_gate_proj_kernel(%arg0: memref<2x128xf32, #tpu.memory_space<vmem>>, %arg1: memref<128x256xf32, #tpu.memory_space<vmem>>, %arg2: memref<1x256xf32, #tpu.memory_space<vmem>>, %arg3: memref<1x128xf32, #tpu.memory_space<vmem>>, %arg4: memref<1x128xf32, #tpu.memory_space<vmem>>, %arg5: memref<2x256xf32, #tpu.memory_space<vmem>>, %arg6: memref<2x256xf32, #tpu.memory_space<vmem>>) attributes {dimension_semantics = [], scalar_prefetch = 0 : i64, scratch_operands = 0 : i64, tpu.core_type = #tpu.core_type<tc>} {
    %c0 = arith.constant 0 : index
    %c0_0 = arith.constant 0 : index
    %0 = vector.load %arg0[%c0, %c0_0] : memref<2x128xf32, #tpu.memory_space<vmem>>, vector<2x128xf32>
    %cst = arith.constant dense<0.000000e+00> : vector<2xf32>
    %1 = vector.multi_reduction <add>, %0, %cst [1] : vector<2x128xf32> to vector<2xf32>
    %2 = vector.shape_cast %1 : vector<2xf32> to vector<2x1xf32>
    %cst_1 = arith.constant 1.280000e+02 : f32
    %3 = vector.broadcast %cst_1 : f32 to vector<2x1xf32>
    %4 = arith.divf %2, %3 : vector<2x1xf32>
    %5 = vector.broadcast %4 : vector<2x1xf32> to vector<2x128xf32>
    %6 = arith.subf %0, %5 : vector<2x128xf32>
    %7 = arith.mulf %6, %6 : vector<2x128xf32>
    %cst_2 = arith.constant dense<0.000000e+00> : vector<2xf32>
    %8 = vector.multi_reduction <add>, %7, %cst_2 [1] : vector<2x128xf32> to vector<2xf32>
    %9 = vector.shape_cast %8 : vector<2xf32> to vector<2x1xf32>
    %cst_3 = arith.constant 1.280000e+02 : f32
    %10 = vector.broadcast %cst_3 : f32 to vector<2x1xf32>
    %11 = arith.divf %9, %10 : vector<2x1xf32>
    %12 = vector.broadcast %4 : vector<2x1xf32> to vector<2x128xf32>
    %13 = arith.subf %0, %12 : vector<2x128xf32>
    %cst_4 = arith.constant 9.99999974E-6 : f32
    %14 = vector.broadcast %cst_4 : f32 to vector<2x1xf32>
    %15 = arith.addf %11, %14 : vector<2x1xf32>
    %16 = math.rsqrt %15 : vector<2x1xf32>
    %17 = vector.broadcast %16 : vector<2x1xf32> to vector<2x128xf32>
    %18 = arith.mulf %13, %17 : vector<2x128xf32>
    %c0_5 = arith.constant 0 : index
    %c0_6 = arith.constant 0 : index
    %19 = vector.load %arg3[%c0_5, %c0_6] : memref<1x128xf32, #tpu.memory_space<vmem>>, vector<1x128xf32>
    %20 = vector.broadcast %19 : vector<1x128xf32> to vector<2x128xf32>
    %21 = arith.mulf %18, %20 : vector<2x128xf32>
    %c0_7 = arith.constant 0 : index
    %c0_8 = arith.constant 0 : index
    %22 = vector.load %arg4[%c0_7, %c0_8] : memref<1x128xf32, #tpu.memory_space<vmem>>, vector<1x128xf32>
    %23 = vector.broadcast %22 : vector<1x128xf32> to vector<2x128xf32>
    %24 = arith.addf %21, %23 : vector<2x128xf32>
    %c0_9 = arith.constant 0 : index
    %c0_10 = arith.constant 0 : index
    %25 = vector.load %arg1[%c0_9, %c0_10] : memref<128x256xf32, #tpu.memory_space<vmem>>, vector<128x256xf32>
    %cst_11 = arith.constant dense<0.000000e+00> : vector<2x256xf32>
    %26 = tpu.matmul %24, %25, %cst_11 {dimension_numbers = #tpu.dot_dimension_numbers<[1], [0], [0], [1], [0, 0, 1, 1], [], []>} : vector<2x128xf32>, vector<128x256xf32>, vector<2x256xf32> -> vector<2x256xf32>
    %c0_12 = arith.constant 0 : index
    %c0_13 = arith.constant 0 : index
    %27 = vector.load %arg2[%c0_12, %c0_13] : memref<1x256xf32, #tpu.memory_space<vmem>>, vector<1x256xf32>
    %28 = vector.broadcast %27 : vector<1x256xf32> to vector<2x256xf32>
    %29 = arith.addf %26, %28 : vector<2x256xf32>
    %c0_14 = arith.constant 0 : index
    %c0_15 = arith.constant 0 : index
    %30 = vector.load %arg6[%c0_14, %c0_15] : memref<2x256xf32, #tpu.memory_space<vmem>>, vector<2x256xf32>
    tpu.vector_store %arg6[%c0_14, %c0_15], %29 {strides = array<i32>} : memref<2x256xf32, #tpu.memory_space<vmem>>, vector<2x256xf32>,
    %31 = arith.negf %29 : vector<2x256xf32>
    %32 = math.exp %31 : vector<2x256xf32>
    %cst_16 = arith.constant 1.000000e+00 : f32
    %33 = vector.broadcast %cst_16 : f32 to vector<2x256xf32>
    %34 = arith.addf %33, %32 : vector<2x256xf32>
    %35 = arith.divf %33, %34 : vector<2x256xf32>
    %c0_17 = arith.constant 0 : index
    %c0_18 = arith.constant 0 : index
    %36 = vector.load %arg5[%c0_17, %c0_18] : memref<2x256xf32, #tpu.memory_space<vmem>>, vector<2x256xf32>
    tpu.vector_store %arg5[%c0_17, %c0_18], %35 {strides = array<i32>} : memref<2x256xf32, #tpu.memory_space<vmem>>, vector<2x256xf32>,
    return
  }
}

</mosaic_0001>

<llo_original>
// kernel: tpu_custom_call.1
$region0: #{tpu_custom_call.1}
  #allocation0 [shape = 'u32[]', space=smem, size = 0x4, offset = 0x4, fixed_abs, tag = 'smem constant byte address 0x4 - core index']
  #allocation1 [shape = 'u32[144,128]{1,0:T(1,128)}', space=vmem, size = 0x12000, scoped, tag = 'internal scratch']
  %s0 = inlined_call_operand.hbm [shape: f32[2,128], index: 0, kind: input, shape index: {}]
  %s1 = inlined_call_operand.hbm [shape: f32[128,256], index: 1, kind: input, shape index: {}]
  %s2 = inlined_call_operand.vmem [shape: f32[1,256], index: 2, kind: input, shape index: {}]
  %s3 = inlined_call_operand.vmem [shape: f32[1,128], index: 3, kind: input, shape index: {}]
  %s4 = inlined_call_operand.vmem [shape: f32[1,128], index: 4, kind: input, shape index: {}]
  %s5 = inlined_call_operand.hbm [shape: f32[2,256], index: 5, kind: output, shape index: {0}]
  %s6 = inlined_call_operand.hbm [shape: f32[2,256], index: 6, kind: output, shape index: {1}]
  %7 = xla_tuple %s5, %s6
  %s8 = sld [smem:[#allocation0]]
  $region46: #{tpu_custom_call.1} parent=0
    _
  %s10 = ssub.s32 1, %s8
  %s11 = scalar_select 0, %s10, %s8
  $region1: #{tpu_custom_call.1} parent=0
    #allocation2 [shape = 'u8[1024]{0}', space=vmem, size = 0x400, scoped, tag = 'input window, operand 0, single buffered']
    #allocation3 [shape = 's32[1]{0}', space=sflag, size = 0x4, scoped, tag = 'scoped memory for tpu_custom_call.1']
    #allocation4 [shape = 's32[1]{0}', space=sflag, size = 0x4, scoped, tag = 'scoped memory for tpu_custom_call.1']
    #allocation5 [shape = 'u8[131072]{0}', space=vmem, size = 0x20000, scoped, tag = 'input window, operand 1, single buffered']
    #allocation6 [shape = 's32[1]{0}', space=sflag, size = 0x4, scoped, tag = 'scoped memory for tpu_custom_call.1']
    #allocation7 [shape = 'u8[2048]{0}', space=vmem, size = 0x800, scoped, tag = 'output window, operand 0, single buffered']
    #allocation8 [shape = 'u8[2048]{0}', space=vmem, size = 0x800, scoped, tag = 'output window, operand 1, single buffered']
    #allocation9 [shape = 's32[1]{0}', space=sflag, size = 0x4, scoped, tag = 'scoped memory for tpu_custom_call.1']
    %12 = vsyncpa [#allocation3], 0
    %13 = vsyncpa [#allocation6], 0
    %14 = vsyncpa [#allocation4], 0
    %15 = vsyncpa [#allocation9], 0
    // Predicated region
    $region2: #{tpu_custom_call.1} parent=1 // pred_check
      _
    $region3: #{tpu_custom_call.1} parent=1 // pred_check_branch
      %17 = sbr.rel (0) target = $region5
    $region4: #{tpu_custom_call.1} parent=1 // pred_region
      %s19 = ssub.s32 32, 32
      %20 = vsyncadd [#allocation3], %s19
      %s22 = sshll.u32 [#allocation2], 4
      %s23 = int_to_ptr.vmem [resolvable:$true] %s22
      %25 = dma.hbm_to_vmem [thread:$0]  %s0, 32, %s23, [#allocation3]
    $region5: #{tpu_custom_call.1} parent=1 // pred_fallthru
      _
    // Predicated region
    $region6: #{tpu_custom_call.1} parent=1 // pred_check
      _
    $region7: #{tpu_custom_call.1} parent=1 // pred_check_branch
      %27 = sbr.rel (0) target = $region9
    $region8: #{tpu_custom_call.1} parent=1 // pred_region
      %s29 = ssub.s32 4096, 4096
      %30 = vsyncadd [#allocation6], %s29
      %s31 = sshll.u32 [#allocation5], 4
      %s32 = int_to_ptr.vmem [resolvable:$true] %s31
      %37 = dma.hbm_to_vmem [thread:$0]  %s1, 4096, %s32, [#allocation6], 256, 256, 16
    $region9: #{tpu_custom_call.1} parent=1 // pred_fallthru
      _
    // Predicated region
    $region10: #{tpu_custom_call.1} parent=1 // pred_check
      _
    $region11: #{tpu_custom_call.1} parent=1 // pred_check_branch
      %39 = sbr.rel (0) target = $region13
    $region12: #{tpu_custom_call.1} parent=1 // pred_region
      _
    $region13: #{tpu_custom_call.1} parent=1 // pred_fallthru
      _
    // Predicated region
    $region14: #{tpu_custom_call.1} parent=1 // pred_check
      _
    $region15: #{tpu_custom_call.1} parent=1 // pred_check_branch
      %41 = sbr.rel (0) target = $region17
    $region16: #{tpu_custom_call.1} parent=1 // pred_region
      _
    $region17: #{tpu_custom_call.1} parent=1 // pred_fallthru
      _
    // Predicated region
    $region18: #{tpu_custom_call.1} parent=1 // pred_check
      _
    $region19: #{tpu_custom_call.1} parent=1 // pred_check_branch
      %43 = sbr.rel (0) target = $region21
    $region20: #{tpu_custom_call.1} parent=1 // pred_region
      _
    $region21: #{tpu_custom_call.1} parent=1 // pred_fallthru
      _
    // Predicated region
    $region22: #{tpu_custom_call.1} parent=1 // pred_check
      _
    $region23: #{tpu_custom_call.1} parent=1 // pred_check_branch
      %45 = sbr.rel (0) target = $region25
    $region24: #{tpu_custom_call.1} parent=1 // pred_region
      %46 = dma.done [#allocation3], 32
    $region25: #{tpu_custom_call.1} parent=1 // pred_fallthru
      _
    // Predicated region
    $region26: #{tpu_custom_call.1} parent=1 // pred_check
      _
    $region27: #{tpu_custom_call.1} parent=1 // pred_check_branch
      %48 = sbr.rel (0) target = $region29
    $region28: #{tpu_custom_call.1} parent=1 // pred_region
      %49 = dma.done [#allocation6], 4096
    $region29: #{tpu_custom_call.1} parent=1 // pred_fallthru
      _
    %v50 = vld [vmem:[#allocation2] sm:$0x3]
    %vm51 = vcmask 1041408
    %v52 = vsel %vm51, %v50, 0.0
    %53 = vadd.xlane.f32.xlu0 %v52
    %v54 = vpop.xlane.xlu0 %53
    %v55 = vrcp.pop 128.0
    %v56 = vmul.f32 %v54, %v55
    %v57 = vsub.f32 %v50, %v56
    %v58 = vmul.f32 %v57, %v57
    %v59 = vsel %vm51, %v58, 0.0
    %60 = vadd.xlane.f32.xlu0 %v59
    %v61 = vpop.xlane.xlu0 %60
    %v62 = vmul.f32 %v61, %v55
    %v63 = vadd.f32 %v62, 1e-05
    %v64 = vrsqrt.pop %v63
    %v65 = vmul.f32 %v57, %v64
    %v66 = vld [vmem:[%s3] sm:$0x1]
    %v68 = vlaneseq
    %v69 = vshrl.u32 %v68, 7
    %v70 = vsub.s32 0, %v69
    %v71 = vrot.slane %v66, %v70
    %v73 = vmul.f32 %v65, %v71
    %v74 = vld [vmem:[%s4] sm:$0x1]
    %v76 = vlaneseq
    %v77 = vshrl.u32 %v76, 7
    %v78 = vsub.s32 0, %v77
    %v79 = vrot.slane %v74, %v78
    %v81 = vadd.f32 %v73, %v79
    %v82 = vld [vmem:[#allocation5] sm:$0xff]
    %v83 = vld [vmem:[#allocation5 + $0x8] sm:$0xff]
    %v84 = vld [vmem:[#allocation5 + $0x10] sm:$0xff]
    %v85 = vld [vmem:[#allocation5 + $0x18] sm:$0xff]
    %v86 = vld [vmem:[#allocation5 + $0x20] sm:$0xff]
    %v87 = vld [vmem:[#allocation5 + $0x28] sm:$0xff]
    %v88 = vld [vmem:[#allocation5 + $0x30] sm:$0xff]
    %v89 = vld [vmem:[#allocation5 + $0x38] sm:$0xff]
    %v90 = vld [vmem:[#allocation5 + $0x40] sm:$0xff]
    %v91 = vld [vmem:[#allocation5 + $0x48] sm:$0xff]
    %v92 = vld [vmem:[#allocation5 + $0x50] sm:$0xff]
    %v93 = vld [vmem:[#allocation5 + $0x58] sm:$0xff]
    %v94 = vld [vmem:[#allocation5 + $0x60] sm:$0xff]
    %v95 = vld [vmem:[#allocation5 + $0x68] sm:$0xff]
    %v96 = vld [vmem:[#allocation5 + $0x70] sm:$0xff]
    %v97 = vld [vmem:[#allocation5 + $0x78] sm:$0xff]
    %v98 = vld [vmem:[#allocation5 + $0x80] sm:$0xff]
    %v99 = vld [vmem:[#allocation5 + $0x88] sm:$0xff]
    %v100 = vld [vmem:[#allocation5 + $0x90] sm:$0xff]
    %v101 = vld [vmem:[#allocation5 + $0x98] sm:$0xff]
    %v102 = vld [vmem:[#allocation5 + $0xa0] sm:$0xff]
    %v103 = vld [vmem:[#allocation5 + $0xa8] sm:$0xff]
    %v104 = vld [vmem:[#allocation5 + $0xb0] sm:$0xff]
    %v105 = vld [vmem:[#allocation5 + $0xb8] sm:$0xff]
    %v106 = vld [vmem:[#allocation5 + $0xc0] sm:$0xff]
    %v107 = vld [vmem:[#allocation5 + $0xc8] sm:$0xff]
    %v108 = vld [vmem:[#allocation5 + $0xd0] sm:$0xff]
    %v109 = vld [vmem:[#allocation5 + $0xd8] sm:$0xff]
    %v110 = vld [vmem:[#allocation5 + $0xe0] sm:$0xff]
    %v111 = vld [vmem:[#allocation5 + $0xe8] sm:$0xff]
    %v112 = vld [vmem:[#allocation5 + $0xf0] sm:$0xff]
    %v113 = vld [vmem:[#allocation5 + $0xf8] sm:$0xff]
    %v114 = vld [vmem:[%s2] sm:$0x3]
    %v116 = vlaneseq
    %v117 = vshrl.u32 %v116, 7
    %v118 = vsub.s32 0, %v117
    %v119 = vrot.slane %v114, %v118
    %v120 = vlaneseq
    %v121 = vshrl.u32 %v120, 7
    %v122 = vsub.s32 1, %v121
    %v123 = vrot.slane %v114, %v122
    %126 = vmatprep.subr.mxu0 %v83
    %127 = vmatpush1.msra.mxu0 %v82
    %128 = vmatprep.subr.mxu0 %v85
    %129 = vmatpush1.msra.mxu0 %v84
    %130 = vmatprep.subr.mxu0 %v87
    %131 = vmatpush1.msra.mxu0 %v86
    %132 = vmatprep.subr.mxu0 %v89
    %133 = vmatpush1.msra.mxu0 %v88
    %134 = vmatprep.subr.mxu0 %v91
    %135 = vmatpush1.msra.mxu0 %v90
    %136 = vmatprep.subr.mxu0 %v93
    %137 = vmatpush1.msra.mxu0 %v92
    %138 = vmatprep.subr.mxu0 %v95
    %139 = vmatpush1.msra.mxu0 %v94
    %140 = vmatprep.subr.mxu0 %v97
    %141 = vmatpush1.msra.mxu0 %v96
    %142 = vmatprep.subr.mxu0 %v99
    %143 = vmatpush1.msra.mxu0 %v98
    %144 = vmatprep.subr.mxu0 %v101
    %145 = vmatpush1.msra.mxu0 %v100
    %146 = vmatprep.subr.mxu0 %v103
    %147 = vmatpush1.msra.mxu0 %v102
    %148 = vmatprep.subr.mxu0 %v105
    %149 = vmatpush1.msra.mxu0 %v104
    %150 = vmatprep.subr.mxu0 %v107
    %151 = vmatpush1.msra.mxu0 %v106
    %152 = vmatprep.subr.mxu0 %v109
    %153 = vmatpush1.msra.mxu0 %v108
    %154 = vmatprep.subr.mxu0 %v111
    %155 = vmatpush1.msra.mxu0 %v110
    %156 = vmatprep.subr.mxu0 %v113
    %157 = vmatpush1.msra.mxu0 %v112
    %158 = vmatprep.subr.mxu0 0.0
    %159 = vmatpush1.msra.mxu0 0.0
    %160 = vmatprep.subr.mxu0 0.0
    %161 = vmatpush1.msra.mxu0 0.0
    %162 = vmatprep.subr.mxu0 0.0
    %163 = vmatpush1.msra.mxu0 0.0
    %164 = vmatprep.subr.mxu0 0.0
    %165 = vmatpush1.msra.mxu0 0.0
    %166 = vmatprep.subr.mxu0 0.0
    %167 = vmatpush1.msra.mxu0 0.0
    %168 = vmatprep.subr.mxu0 0.0
    %169 = vmatpush1.msra.mxu0 0.0
    %170 = vmatprep.subr.mxu0 0.0
    %171 = vmatpush1.msra.mxu0 0.0
    %172 = vmatprep.subr.mxu0 0.0
    %173 = vmatpush1.msra.mxu0 0.0
    %174 = vmatprep.subr.mxu0 0.0
    %175 = vmatpush1.msra.mxu0 0.0
    %176 = vmatprep.subr.mxu0 0.0
    %177 = vmatpush1.msra.mxu0 0.0
    %178 = vmatprep.subr.mxu0 0.0
    %179 = vmatpush1.msra.mxu0 0.0
    %180 = vmatprep.subr.mxu0 0.0
    %181 = vmatpush1.msra.mxu0 0.0
    %182 = vmatprep.subr.mxu0 0.0
    %183 = vmatpush1.msra.mxu0 0.0
    %184 = vmatprep.subr.mxu0 0.0
    %185 = vmatpush1.msra.mxu0 0.0
    %186 = vmatprep.subr.mxu0 0.0
    %187 = vmatpush1.msra.mxu0 0.0
    %188 = vmatprep.subr.mxu0 0.0
    %189 = vmatpush1.msra.mxu0 0.0
    %190 = vmatprep.mubr.f32.mxu0 0.0
    %191 = vmatmul.mubr.f32.gmra.mrb[0].mxu0 %v81
    %v192 = vpop.f32.mrb[0].mxu0
    %v193 = vadd.f32 %v119, %v192
    %v194 = vpop.f32.mrb[0].mxu0
    %v195 = vadd.f32 %v123, %v194
    %196 = vdwg.mxu0
    %v199 = vcombine.low %v193, %v195
    %v201 = vunpack.c.l.s4 1983009808
    %v202 = vunpack.c.0.s8 %v201
    %v203 = vlaneseq
    %v204 = vshrl.u32 %v203, 7
    %v205 = vsub.s32 %v202, %v204
    %v206 = vrot.slane %v199, %v205
    %208 = vst [vmem:[#allocation8] sm:$0xf] %v206
    %v209 = vxor.u32 %v193, 2147483648
    %v210 = vxor.u32 %v195, 2147483648
    %v211 = vmul.f32 %v209, 1.442695
    %v212 = vpow.pop %v211
    %v213 = vmul.f32 %v210, 1.442695
    %v214 = vpow.pop %v213
    %v215 = vadd.f32 %v212, 1.0
    %v216 = vadd.f32 %v214, 1.0
    %v217 = vrcp.pop %v215
    %v218 = vmul.f32 1.0, %v217
    %v219 = vrcp.pop %v216
    %v220 = vmul.f32 1.0, %v219
    %v223 = vcombine.low %v218, %v220
    %v225 = vunpack.c.l.s4 1983009808
    %v226 = vunpack.c.0.s8 %v225
    %v227 = vlaneseq
    %v228 = vshrl.u32 %v227, 7
    %v229 = vsub.s32 %v226, %v228
    %v230 = vrot.slane %v223, %v229
    %232 = vst [vmem:[#allocation7] sm:$0xf] %v230
    // Predicated region
    $region30: #{tpu_custom_call.1} parent=1 // pred_check
      _
    $region31: #{tpu_custom_call.1} parent=1 // pred_check_branch
      %234 = sbr.rel (0) target = $region33
    $region32: #{tpu_custom_call.1} parent=1 // pred_region
      %s236 = ssub.s32 64, 64
      %237 = vsyncadd [#allocation4], %s236
      %s239 = sshll.u32 [#allocation7], 4
      %s240 = int_to_ptr.vmem [resolvable:$true] %s239
      %242 = dma.vmem_to_hbm [thread:$0]  %s240, 64, %s5, [#allocation4]
    $region33: #{tpu_custom_call.1} parent=1 // pred_fallthru
      _
    // Predicated region
    $region34: #{tpu_custom_call.1} parent=1 // pred_check
      _
    $region35: #{tpu_custom_call.1} parent=1 // pred_check_branch
      %244 = sbr.rel (0) target = $region37
    $region36: #{tpu_custom_call.1} parent=1 // pred_region
      %s246 = ssub.s32 64, 64
      %247 = vsyncadd [#allocation9], %s246
      %s249 = sshll.u32 [#allocation8], 4
      %s250 = int_to_ptr.vmem [resolvable:$true] %s249
      %252 = dma.vmem_to_hbm [thread:$0]  %s250, 64, %s6, [#allocation9]
    $region37: #{tpu_custom_call.1} parent=1 // pred_fallthru
      _
    // Predicated region
    $region38: #{tpu_custom_call.1} parent=1 // pred_check
      _
    $region39: #{tpu_custom_call.1} parent=1 // pred_check_branch
      %254 = sbr.rel (0) target = $region41
    $region40: #{tpu_custom_call.1} parent=1 // pred_region
      %255 = dma.done [#allocation4], 64
    $region41: #{tpu_custom_call.1} parent=1 // pred_fallthru
      _
    // Predicated region
    $region42: #{tpu_custom_call.1} parent=1 // pred_check
      _
    $region43: #{tpu_custom_call.1} parent=1 // pred_check_branch
      %257 = sbr.rel (0) target = $region45
    $region44: #{tpu_custom_call.1} parent=1 // pred_region
      %258 = dma.done [#allocation9], 64
    $region45: #{tpu_custom_call.1} parent=1 // pred_fallthru
      _
    %259 = vsyncpa [#allocation3], 1
    %260 = vsyncpa [#allocation6], 1
    %261 = vsyncpa [#allocation4], 1
    %262 = vsyncpa [#allocation9], 1

</llo_original>
